<compile_context>
chip_gen: v6e
topology: v6e:2x2x1
jax: 0.10.0
libtpu: 0.0.40
codegen_flags: <defaults>
</compile_context>

<pallas_src>
import jax
import jax.numpy as jnp
from jax.experimental import pallas as pl
from jax.experimental.pallas import tpu as pltpu


def _round_up(a: int, b: int) -> int:
    return ((a + b - 1) // b) * b


# ---------------------------------------------------------------------------
# Kernel body: one (tm, D) row tile x one (th) hidden tile per grid step.
# Grid = (row_tiles [parallel], hidden_tiles [arbitrary/reduction]).
# ---------------------------------------------------------------------------
def _swiglu_kernel(x_ref, wu_ref, wg_ref, wd_ref, o_ref, acc_ref):
    h = pl.program_id(1)

    @pl.when(h == 0)
    def _init():
        acc_ref[...] = jnp.zeros_like(acc_ref)

    x = x_ref[...]                                                   # (tm, D)
    up = jnp.dot(x, wu_ref[...], preferred_element_type=jnp.float32)    # (tm, th) f32
    gate = jnp.dot(x, wg_ref[...], preferred_element_type=jnp.float32)  # (tm, th) f32
    hidden = up * (gate * jax.nn.sigmoid(gate))                      # SwiGLU, f32

    acc_ref[...] += jnp.dot(hidden.astype(wd_ref.dtype), wd_ref[...],
                            preferred_element_type=jnp.float32)      # (tm, D) f32

    @pl.when(h == pl.num_programs(1) - 1)
    def _finalize():
        o_ref[...] = acc_ref[...].astype(o_ref.dtype)


# ---------------------------------------------------------------------------
# Per-generation tiling / VMEM defaults.
# ---------------------------------------------------------------------------
def _chip_config():
    kind = ""
    try:
        kind = jax.devices()[0].device_kind.lower()
    except Exception:
        pass
    if "v7" in kind:
        # 64 MiB VMEM per core, 2 TensorCores: smaller th, keep scratch headroom.
        return dict(tm=640, th=256, vmem_cap=52 * 1024 * 1024, n_tc=2)
    if "v6" in kind:
        # 128 MiB VMEM, 1 TC: big row + hidden tiles -> MXU-bound.
        return dict(tm=768, th=1024, vmem_cap=100 * 1024 * 1024, n_tc=1)
    if "v5" in kind and ("lite" in kind or "v5e" in kind):
        # v5e: lower MXU peak, tm=512 is already past the roofline crossover.
        return dict(tm=512, th=512, vmem_cap=100 * 1024 * 1024, n_tc=1)
    # Unknown generation: conservative budget that fits a 64 MiB-VMEM part.
    return dict(tm=512, th=512, vmem_cap=56 * 1024 * 1024, n_tc=2)


def _vmem_bytes(tm, th, D, in_sz, w_sz, out_sz):
    return (2 * tm * D * in_sz          # x tile, double-buffered
            + 2 * 2 * D * th * w_sz     # w_up + w_gate tiles, double-buffered
            + 2 * th * D * w_sz         # w_down tile, double-buffered
            + 2 * tm * D * out_sz       # out tile, double-buffered
            + tm * D * 4                # f32 accumulator scratch
            + 2 * tm * th * 4           # up / gate f32 intermediates
            + tm * th * max(w_sz, 2))   # hidden cast for the down projection


# ---------------------------------------------------------------------------
# Wrapper.  x: [B, S, D] -> [B, S, D].
# Weights are pre-transposed vs nn.Linear: w_up/w_gate: [D, H], w_down: [H, D].
# ---------------------------------------------------------------------------
def mlp_swiglu(x, w_up, w_gate, w_down, *, tm=None, th=None,
               compute_dtype=jnp.bfloat16):
    B, S, D = x.shape
    H = w_up.shape[1]
    assert w_up.shape == (D, H) and w_gate.shape == (D, H) and w_down.shape == (H, D)
    out_dtype = x.dtype

    cfg = _chip_config()
    tm_default = int(tm) if tm is not None else cfg["tm"]
    th_default = int(th) if th is not None else cfg["th"]

    if compute_dtype is not None:
        x = x.astype(compute_dtype)
        w_up = w_up.astype(compute_dtype)
        w_gate = w_gate.astype(compute_dtype)
        w_down = w_down.astype(compute_dtype)

    N = B * S
    x2 = x.reshape(N, D)                      # free bitcast-style reshape, no copy

    in_sz = jnp.dtype(x2.dtype).itemsize
    w_sz = jnp.dtype(w_up.dtype).itemsize
    out_sz = jnp.dtype(out_dtype).itemsize

    # ---- token-axis tile (no padding: grid uses cdiv + masked edge block) ----
    sub = max(8, 32 // in_sz)                 # min sublane tile: f32=8, bf16=16, 8-bit=32
    tm_eff = _round_up(max(sub, min(tm_default, _round_up(N, sub))), sub)
    # Dual-TensorCore chips: make sure the parallel axis has >= 2 steps.
    if cfg["n_tc"] >= 2 and pl.cdiv(N, tm_eff) < 2 and N > sub:
        tm_eff = max(sub, _round_up(pl.cdiv(N, 2), sub))
    # ---- hidden-axis (reduction) tile ----
    th_eff = th_default if H > th_default else H

    # Shrink tiles (th first, then tm) if the VMEM estimate would exceed the budget.
    budget = cfg["vmem_cap"] - 6 * 1024 * 1024
    while _vmem_bytes(tm_eff, th_eff, D, in_sz, w_sz, out_sz) > budget:
        if th_eff > 128 and th_eff % 256 == 0:
            th_eff //= 2
        elif tm_eff > sub:
            tm_eff = max(sub, _round_up(tm_eff // 2, sub))
        else:
            break

    # Zero-pad H only if the hidden tile does not divide it (zeros contribute 0 through
    # SiLU and the down projection).  In production this padding is done once at
    # weight-load time, not per call.
    H_pad = _round_up(H, th_eff)
    if H_pad != H:
        w_up = jnp.pad(w_up, ((0, 0), (0, H_pad - H)))
        w_gate = jnp.pad(w_gate, ((0, 0), (0, H_pad - H)))
        w_down = jnp.pad(w_down, ((0, H_pad - H), (0, 0)))
    n_h = H_pad // th_eff

    grid_i = pl.cdiv(N, tm_eff)
    grid = (grid_i, n_h)

    est = _vmem_bytes(tm_eff, th_eff, D, in_sz, w_sz, out_sz)
    vmem_limit = int(min(cfg["vmem_cap"],
                         max(32 * 1024 * 1024, est + 6 * 1024 * 1024)))

    cost = pl.CostEstimate(
        flops=2 * N * D * H * 3,
        transcendentals=N * H,
        bytes_accessed=(N * D * in_sz
                        + grid_i * (2 * D * H_pad + H_pad * D) * w_sz
                        + N * D * out_sz),
    )

    out = pl.pallas_call(
        _swiglu_kernel,
        out_shape=jax.ShapeDtypeStruct((N, D), out_dtype),
        grid_spec=pltpu.PrefetchScalarGridSpec(
            num_scalar_prefetch=0,
            grid=grid,
            in_specs=[
                pl.BlockSpec((tm_eff, D), lambda i, h: (i, 0)),    # x row tile
                pl.BlockSpec((D, th_eff), lambda i, h: (0, h)),    # W_up tile
                pl.BlockSpec((D, th_eff), lambda i, h: (0, h)),    # W_gate tile
                pl.BlockSpec((th_eff, D), lambda i, h: (h, 0)),    # W_down tile
            ],
            out_specs=pl.BlockSpec((tm_eff, D), lambda i, h: (i, 0)),
            scratch_shapes=[pltpu.VMEM((tm_eff, D), jnp.float32)],
        ),
        compiler_params=pltpu.CompilerParams(
            dimension_semantics=("parallel", "arbitrary"),
            vmem_limit_bytes=vmem_limit,
        ),
        cost_estimate=cost,
    )(x2, w_up, w_gate, w_down)

    return out.reshape(B, S, D)


# ---------------------------------------------------------------------------
# Reference + tests.
# ---------------------------------------------------------------------------
def _reference(x, w_up, w_gate, w_down):
    up = x @ w_up
    gate = x @ w_gate
    h = up * (gate * jax.nn.sigmoid(gate))
    return h @ w_down


def _make_inputs(keys, B, S, D, H):
    kx, ku, kg, kd = keys
    x = jax.random.normal(kx, (B, S, D), dtype=jnp.float32)
    # Deterministic "Linear"-style init (uniform in +/- 1/sqrt(fan_in)), no bias.
    w_up = jax.random.uniform(ku, (D, H), jnp.float32, -1.0, 1.0) / jnp.sqrt(D)
    w_gate = jax.random.uniform(kg, (D, H), jnp.float32, -1.0, 1.0) / jnp.sqrt(D)
    w_down = jax.random.uniform(kd, (H, D), jnp.float32, -1.0, 1.0) / jnp.sqrt(H)
    return x, w_up, w_gate, w_down


if __name__ == "__main__":
    keys = jax.random.split(jax.random.PRNGKey(0), 12)

    # Test 1: module-like toy shapes (d_model=32, hidden_dim=64), f32 exact path.
    x, wu, wg, wd = _make_inputs(keys[0:4], B=2, S=8, D=32, H=64)
    y = jax.block_until_ready(mlp_swiglu(x, wu, wg, wd, compute_dtype=jnp.float32))
    y_ref = _reference(x, wu, wg, wd)
    assert jnp.allclose(y, y_ref, atol=1e-4, rtol=1e-4), "mismatch (toy shapes)"

    # Test 2: partial edge row block (N=46, tm=16 -> 3 tiles, last one masked) and a
    # 3-step hidden reduction, f32.  Verifies edge-block write masking.
    x2, wu2, wg2, wd2 = _make_inputs(keys[4:8], B=2, S=23, D=128, H=384)
    y2 = jax.block_until_ready(
        mlp_swiglu(x2, wu2, wg2, wd2, tm=16, th=128, compute_dtype=jnp.float32))
    y2_ref = _reference(x2, wu2, wg2, wd2)
    assert jnp.allclose(y2, y2_ref, atol=1e-3, rtol=1e-3), "mismatch (edge-block path)"

    # Test 3: default perf path (chip-default tiles, bf16 compute, f32 accumulation).
    y3 = jax.block_until_ready(mlp_swiglu(x2, wu2, wg2, wd2))
    assert jnp.allclose(y3.astype(jnp.float32), y2_ref, atol=5e-2, rtol=5e-2), \
        "mismatch (bf16 default path)"

    # Test 4: hidden dim not divisible by the hidden tile (H=320, th=256) -> exercises
    # the zero-padded weight path, f32.
    x4, wu4, wg4, wd4 = _make_inputs(keys[8:12], B=2, S=16, D=128, H=320)
    y4 = jax.block_until_ready(
        mlp_swiglu(x4, wu4, wg4, wd4, tm=32, th=256, compute_dtype=jnp.float32))
    y4_ref = _reference(x4, wu4, wg4, wd4)
    assert jnp.allclose(y4, y4_ref, atol=1e-3, rtol=1e-3), "mismatch (H-pad path)"

    print("KERNEL_OK")
</pallas_src>

<mosaic_0001>
module attributes {stable_mosaic.version = 11 : i64} {
  func.func @_swiglu_kernel(%arg0: i32, %arg1: i32, %arg2: memref<8x32xf32, #tpu.memory_space<vmem>>, %arg3: memref<32x64xf32, #tpu.memory_space<vmem>>, %arg4: memref<32x64xf32, #tpu.memory_space<vmem>>, %arg5: memref<64x32xf32, #tpu.memory_space<vmem>>, %arg6: memref<8x32xf32, #tpu.memory_space<vmem>>, %arg7: memref<8x32xf32, #tpu.memory_space<vmem>>) attributes {dimension_semantics = [#tpu.dimension_semantics<parallel>, #tpu.dimension_semantics<arbitrary>], iteration_bounds = array<i64: 2, 1>, scalar_prefetch = 0 : i64, scratch_operands = 1 : i64, tpu.core_type = #tpu.core_type<tc>, window_params = [{transform_indices = @transform_0, window_bounds = array<i64: 8, 32>}, {transform_indices = @transform_1, window_bounds = array<i64: 32, 64>}, {transform_indices = @transform_2, window_bounds = array<i64: 32, 64>}, {transform_indices = @transform_3, window_bounds = array<i64: 64, 32>}, {transform_indices = @transform_4, window_bounds = array<i64: 8, 32>}]} {
    %c0_i32 = arith.constant 0 : i32
    %0 = arith.cmpi eq, %arg1, %c0_i32 : i32
    %1 = arith.extui %0 : i1 to i32
    %c0_i32_0 = arith.constant 0 : i32
    %2 = arith.cmpi ne, %1, %c0_i32_0 : i32
    scf.if %2 {
      %cst_17 = arith.constant 0.000000e+00 : f32
      %23 = vector.broadcast %cst_17 : f32 to vector<8x32xf32>
      %c0_18 = arith.constant 0 : index
      %c0_19 = arith.constant 0 : index
      %24 = vector.load %arg7[%c0_18, %c0_19] : memref<8x32xf32, #tpu.memory_space<vmem>>, vector<8x32xf32>
      tpu.vector_store %arg7[%c0_18, %c0_19], %23 {strides = array<i32>} : memref<8x32xf32, #tpu.memory_space<vmem>>, vector<8x32xf32>,
    } else {
    }
    %c0 = arith.constant 0 : index
    %c0_1 = arith.constant 0 : index
    %3 = vector.load %arg2[%c0, %c0_1] : memref<8x32xf32, #tpu.memory_space<vmem>>, vector<8x32xf32>
    %c0_2 = arith.constant 0 : index
    %c0_3 = arith.constant 0 : index
    %4 = vector.load %arg3[%c0_2, %c0_3] : memref<32x64xf32, #tpu.memory_space<vmem>>, vector<32x64xf32>
    %cst = arith.constant dense<0.000000e+00> : vector<8x64xf32>
    %5 = tpu.matmul %3, %4, %cst {dimension_numbers = #tpu.dot_dimension_numbers<[1], [0], [0], [1], [0, 0, 1, 1], [], []>} : vector<8x32xf32>, vector<32x64xf32>, vector<8x64xf32> -> vector<8x64xf32>
    %c0_4 = arith.constant 0 : index
    %c0_5 = arith.constant 0 : index
    %6 = vector.load %arg4[%c0_4, %c0_5] : memref<32x64xf32, #tpu.memory_space<vmem>>, vector<32x64xf32>
    %cst_6 = arith.constant dense<0.000000e+00> : vector<8x64xf32>
    %7 = tpu.matmul %3, %6, %cst_6 {dimension_numbers = #tpu.dot_dimension_numbers<[1], [0], [0], [1], [0, 0, 1, 1], [], []>} : vector<8x32xf32>, vector<32x64xf32>, vector<8x64xf32> -> vector<8x64xf32>
    %8 = arith.negf %7 : vector<8x64xf32>
    %9 = math.exp %8 : vector<8x64xf32>
    %cst_7 = arith.constant 1.000000e+00 : f32
    %10 = vector.broadcast %cst_7 : f32 to vector<8x64xf32>
    %11 = arith.addf %10, %9 : vector<8x64xf32>
    %12 = arith.divf %10, %11 : vector<8x64xf32>
    %13 = arith.mulf %7, %12 : vector<8x64xf32>
    %14 = arith.mulf %5, %13 : vector<8x64xf32>
    %c0_8 = arith.constant 0 : index
    %c0_9 = arith.constant 0 : index
    %15 = vector.load %arg7[%c0_8, %c0_9] : memref<8x32xf32, #tpu.memory_space<vmem>>, vector<8x32xf32>
    %c0_10 = arith.constant 0 : index
    %c0_11 = arith.constant 0 : index
    %16 = vector.load %arg5[%c0_10, %c0_11] : memref<64x32xf32, #tpu.memory_space<vmem>>, vector<64x32xf32>
    %cst_12 = arith.constant dense<0.000000e+00> : vector<8x32xf32>
    %17 = tpu.matmul %14, %16, %cst_12 {dimension_numbers = #tpu.dot_dimension_numbers<[1], [0], [0], [1], [0, 0, 1, 1], [], []>} : vector<8x64xf32>, vector<64x32xf32>, vector<8x32xf32> -> vector<8x32xf32>
    %18 = arith.addf %15, %17 : vector<8x32xf32>
    %c0_13 = arith.constant 0 : index
    %c0_14 = arith.constant 0 : index
    %19 = vector.load %arg7[%c0_13, %c0_14] : memref<8x32xf32, #tpu.memory_space<vmem>>, vector<8x32xf32>
    tpu.vector_store %arg7[%c0_13, %c0_14], %18 {strides = array<i32>} : memref<8x32xf32, #tpu.memory_space<vmem>>, vector<8x32xf32>,
    %c0_i32_15 = arith.constant 0 : i32
    %20 = arith.cmpi eq, %arg1, %c0_i32_15 : i32
    %21 = arith.extui %20 : i1 to i32
    %c0_i32_16 = arith.constant 0 : i32
    %22 = arith.cmpi ne, %21, %c0_i32_16 : i32
    scf.if %22 {
      %c0_17 = arith.constant 0 : index
      %c0_18 = arith.constant 0 : index
      %23 = vector.load %arg7[%c0_17, %c0_18] : memref<8x32xf32, #tpu.memory_space<vmem>>, vector<8x32xf32>
      %c0_19 = arith.constant 0 : index
      %c0_20 = arith.constant 0 : index
      %24 = vector.load %arg6[%c0_19, %c0_20] : memref<8x32xf32, #tpu.memory_space<vmem>>, vector<8x32xf32>
      tpu.vector_store %arg6[%c0_19, %c0_20], %23 {strides = array<i32>} : memref<8x32xf32, #tpu.memory_space<vmem>>, vector<8x32xf32>,
    } else {
    }
    return
  }
  func.func @transform_0(%arg0: i32, %arg1: i32) -> (i32, i32) {
    %c0_i32 = arith.constant 0 : i32
    %c0_i32_0 = arith.constant 0 : i32
    return %arg0, %c0_i32 : i32, i32
  }
  func.func @transform_1(%arg0: i32, %arg1: i32) -> (i32, i32) {
    %c0_i32 = arith.constant 0 : i32
    %c0_i32_0 = arith.constant 0 : i32
    return %c0_i32, %arg1 : i32, i32
  }
  func.func @transform_2(%arg0: i32, %arg1: i32) -> (i32, i32) {
    %c0_i32 = arith.constant 0 : i32
    %c0_i32_0 = arith.constant 0 : i32
    return %c0_i32, %arg1 : i32, i32
  }
  func.func @transform_3(%arg0: i32, %arg1: i32) -> (i32, i32) {
    %c0_i32 = arith.constant 0 : i32
    %c0_i32_0 = arith.constant 0 : i32
    return %arg1, %c0_i32 : i32, i32
  }
  func.func @transform_4(%arg0: i32, %arg1: i32) -> (i32, i32) {
    %c0_i32 = arith.constant 0 : i32
    %c0_i32_0 = arith.constant 0 : i32
    return %arg0, %c0_i32 : i32, i32
  }
}

</mosaic_0001>

<llo_original>
// kernel: tpu_custom_call.1
$region0: #{tpu_custom_call.1}
  #allocation0 [shape = 'u32[]', space=smem, size = 0x4, offset = 0x4, fixed_abs, tag = 'smem constant byte address 0x4 - core index']
  #allocation1 [shape = 'u32[144,128]{1,0:T(1,128)}', space=vmem, size = 0x12000, scoped, tag = 'internal scratch']
  #allocation2 [shape = 'f32[8,32]{1,0:T(8,128)}', space=vmem, size = 0x1000, scoped, tag = 'scratch operand']
  %s0 = inlined_call_operand.vmem [shape: f32[16,32], index: 0, kind: input, shape index: {}]
  %s1 = inlined_call_operand.vmem [shape: f32[32,64], index: 1, kind: input, shape index: {}]
  %s2 = inlined_call_operand.vmem [shape: f32[32,64], index: 2, kind: input, shape index: {}]
  %s3 = inlined_call_operand.vmem [shape: f32[64,32], index: 3, kind: input, shape index: {}]
  %s4 = inlined_call_operand.hbm [shape: f32[16,32], index: 4, kind: output, shape index: {}]
  %s5 = sld [smem:[#allocation0]]
  $region57: #{tpu_custom_call.1} parent=0
    _
  %s7 = ssub.s32 1, %s5
  %s8 = scalar_select 0, %s7, %s5
  $region1: #{tpu_custom_call.1} parent=0
    #allocation3 [shape = 'u8[8192]{0}', space=vmem, size = 0x2000, scoped, tag = 'output window, operand 0']
    #allocation4 [shape = 's32[2]{0}', space=sflag, size = 0x8, scoped, tag = 'scoped memory for tpu_custom_call.1']
    %9 = vsyncpa [#allocation4], 0
    %s10 = scalar_lea.sflag [#allocation4], 1
    %11 = vsyncpa %s10, 0
    loop: start=0, step=1, limit=4
    $region2: #{tpu_custom_call.1} parent=1 // loop_pre_header
      _
    $region3: #{tpu_custom_call.1} parent=1 // loop_header
      %s13 = sphi 0, %s17
      %p14 = scmp.ge.s32.totalorder %s13, 4
      %s20 = sphi 0, %s32
      %s21 = sphi 0, %s28
      %s22 = sphi 0, %s20
      %s23 = sphi 0, %s21
      %s24 = sphi 0, %s22
      %s25 = sphi 0, %s23
      %s35 = sphi 0, %s37
      %s38 = sphi 0, %s35
      %s39 = sphi 0, %s38
      %s55 = sphi 0, %s39
      %s61 = sphi 0, %s63
      %s64 = sphi 0, %s61
      %s65 = sphi 0, %s64
      %s81 = sphi 0, %s65
      %s87 = sphi 0, %s89
      %s90 = sphi 0, %s87
      %s91 = sphi 0, %s90
      %s107 = sphi 0, %s91
      %s113 = sphi 0, %s115
      %s116 = sphi 0, %s113
      %s117 = sphi 0, %s116
      %s133 = sphi 0, %s117
      %s139 = sphi 0, %s141
      %s142 = sphi 0, %s139
      %s143 = sphi 0, %s142
      %s159 = sphi 0, %s143
    $region4: #{tpu_custom_call.1} parent=1 // loop_header_branch
      %16 = sbr.rel (%p14) target = $region8
    $region5: #{tpu_custom_call.1} parent=1 // loop_body
      %s18 = ssub.s32 %s13, 1
      %s19 = ssub.s32 %s13, 2
      %s26 = sadd.s32 1, %s21
      %p27 = scmp.ge.s32.totalorder %s26, 1
      %s28 = scalar_select %p27, 0, %s26
      %s29 = sadd.s32 1, %s20
      %s30 = scalar_select %p27, %s29, %s20
      %p31 = scmp.ge.s32.totalorder %s30, 2
      %s32 = scalar_select %p31, 0, %s30
      %s33 = ssub.s32 %s20, %s32
      %p34 = scmp.eq.s32.totalorder %s33, 0
      %s36 = sadd.s32 %s35, 1
      %s37 = scalar_select %p34, %s35, %s36
      %p40 = pneg %p34
      %p41 = scmp.eq.s32.totalorder %s13, 1
      %p42 = por %p40, %p41
      %p43 = scmp.ne.s32.totalorder %s35, %s38
      %p44 = scmp.eq.s32.totalorder %s13, 0
      %p45 = por %p43, %p44
      %p46 = scmp.ne.s32.totalorder %s35, %s38
      %p47 = scmp.eq.s32.totalorder %s18, 1
      %p48 = por %p46, %p47
      %p49 = scmp.ne.s32.totalorder %s38, %s39
      %p50 = scmp.eq.s32.totalorder %s18, 0
      %p51 = por %p49, %p50
      %p52 = scmp.ne.s32.totalorder %s38, %s39
      %p53 = scmp.eq.s32.totalorder %s19, 1
      %p54 = por %p52, %p53
      %p56 = scmp.ne.s32.totalorder %s39, %s55
      %p57 = scmp.eq.s32.totalorder %s19, 0
      %p58 = por %p56, %p57
      %s59 = ssub.s32 %s21, %s28
      %p60 = scmp.eq.s32.totalorder %s59, 0
      %s62 = sadd.s32 %s61, 1
      %s63 = scalar_select %p60, %s61, %s62
      %p66 = pneg %p60
      %p67 = scmp.eq.s32.totalorder %s13, 1
      %p68 = por %p66, %p67
      %p69 = scmp.ne.s32.totalorder %s61, %s64
      %p70 = scmp.eq.s32.totalorder %s13, 0
      %p71 = por %p69, %p70
      %p72 = scmp.ne.s32.totalorder %s61, %s64
      %p73 = scmp.eq.s32.totalorder %s18, 1
      %p74 = por %p72, %p73
      %p75 = scmp.ne.s32.totalorder %s64, %s65
      %p76 = scmp.eq.s32.totalorder %s18, 0
      %p77 = por %p75, %p76
      %p78 = scmp.ne.s32.totalorder %s64, %s65
      %p79 = scmp.eq.s32.totalorder %s19, 1
      %p80 = por %p78, %p79
      %p82 = scmp.ne.s32.totalorder %s65, %s81
      %p83 = scmp.eq.s32.totalorder %s19, 0
      %p84 = por %p82, %p83
      %s85 = ssub.s32 %s21, %s28
      %p86 = scmp.eq.s32.totalorder %s85, 0
      %s88 = sadd.s32 %s87, 1
      %s89 = scalar_select %p86, %s87, %s88
      %p92 = pneg %p86
      %p93 = scmp.eq.s32.totalorder %s13, 1
      %p94 = por %p92, %p93
      %p95 = scmp.ne.s32.totalorder %s87, %s90
      %p96 = scmp.eq.s32.totalorder %s13, 0
      %p97 = por %p95, %p96
      %p98 = scmp.ne.s32.totalorder %s87, %s90
      %p99 = scmp.eq.s32.totalorder %s18, 1
      %p100 = por %p98, %p99
      %p101 = scmp.ne.s32.totalorder %s90, %s91
      %p102 = scmp.eq.s32.totalorder %s18, 0
      %p103 = por %p101, %p102
      %p104 = scmp.ne.s32.totalorder %s90, %s91
      %p105 = scmp.eq.s32.totalorder %s19, 1
      %p106 = por %p104, %p105
      %p108 = scmp.ne.s32.totalorder %s91, %s107
      %p109 = scmp.eq.s32.totalorder %s19, 0
      %p110 = por %p108, %p109
      %s111 = ssub.s32 %s21, %s28
      %p112 = scmp.eq.s32.totalorder %s111, 0
      %s114 = sadd.s32 %s113, 1
      %s115 = scalar_select %p112, %s113, %s114
      %p118 = pneg %p112
      %p119 = scmp.eq.s32.totalorder %s13, 1
      %p120 = por %p118, %p119
      %p121 = scmp.ne.s32.totalorder %s113, %s116
      %p122 = scmp.eq.s32.totalorder %s13, 0
      %p123 = por %p121, %p122
      %p124 = scmp.ne.s32.totalorder %s113, %s116
      %p125 = scmp.eq.s32.totalorder %s18, 1
      %p126 = por %p124, %p125
      %p127 = scmp.ne.s32.totalorder %s116, %s117
      %p128 = scmp.eq.s32.totalorder %s18, 0
      %p129 = por %p127, %p128
      %p130 = scmp.ne.s32.totalorder %s116, %s117
      %p131 = scmp.eq.s32.totalorder %s19, 1
      %p132 = por %p130, %p131
      %p134 = scmp.ne.s32.totalorder %s117, %s133
      %p135 = scmp.eq.s32.totalorder %s19, 0
      %p136 = por %p134, %p135
      %s137 = ssub.s32 %s20, %s32
      %p138 = scmp.eq.s32.totalorder %s137, 0
      %s140 = sadd.s32 %s139, 1
      %s141 = scalar_select %p138, %s139, %s140
      %p144 = pneg %p138
      %p145 = scmp.eq.s32.totalorder %s13, 1
      %p146 = por %p144, %p145
      %p147 = scmp.ne.s32.totalorder %s139, %s142
      %p148 = scmp.eq.s32.totalorder %s13, 0
      %p149 = por %p147, %p148
      %p150 = scmp.ne.s32.totalorder %s139, %s142
      %p151 = scmp.eq.s32.totalorder %s18, 1
      %p152 = por %p150, %p151
      %p153 = scmp.ne.s32.totalorder %s142, %s143
      %p154 = scmp.eq.s32.totalorder %s18, 0
      %p155 = por %p153, %p154
      %p156 = scmp.ne.s32.totalorder %s142, %s143
      %p157 = scmp.eq.s32.totalorder %s19, 1
      %p158 = por %p156, %p157
      %p160 = scmp.ne.s32.totalorder %s143, %s159
      %p161 = scmp.eq.s32.totalorder %s19, 0
      %p162 = por %p160, %p161
      %p163 = scmp.le.s32.totalorder 1, %s13
      %p164 = scmp.lt.s32.totalorder %s13, 3
      %p165 = pnand %p163, %p164
      %p166 = pneg %p165
      // Predicated region
      $region9: #{tpu_custom_call.1} parent=5 // pred_check
        _
      $region10: #{tpu_custom_call.1} parent=5 // pred_check_branch
        %168 = sbr.rel (%p165) target = $region12
      $region11: #{tpu_custom_call.1} parent=5 // pred_region
        %s169 = ssub.s32 %s13, 1
        // Predicated region
        $region13: #{tpu_custom_call.1} parent=11 // pred_check
          %p170 = pneg %p77
        $region14: #{tpu_custom_call.1} parent=11 // pred_check_branch
          %172 = sbr.rel (%p170) target = $region16
        $region15: #{tpu_custom_call.1} parent=11 // pred_region
          %p173 = scmp.lt.s32.totalorder %s23, 0
          %s174 = scalar_select %p173, %s23, 0
          %s175 = smul.addr %s174, 8
          %s176 = scalar_lea.vmem %s1, %s175
        $region16: #{tpu_custom_call.1} parent=11 // pred_fallthru
          _
        // Predicated region
        $region17: #{tpu_custom_call.1} parent=11 // pred_check
          %p177 = pneg %p103
        $region18: #{tpu_custom_call.1} parent=11 // pred_check_branch
          %179 = sbr.rel (%p177) target = $region20
        $region19: #{tpu_custom_call.1} parent=11 // pred_region
          %p180 = scmp.lt.s32.totalorder %s23, 0
          %s181 = scalar_select %p180, %s23, 0
          %s182 = smul.addr %s181, 8
          %s183 = scalar_lea.vmem %s2, %s182
        $region20: #{tpu_custom_call.1} parent=11 // pred_fallthru
          _
        // Predicated region
        $region21: #{tpu_custom_call.1} parent=11 // pred_check
          %p184 = pneg %p129
        $region22: #{tpu_custom_call.1} parent=11 // pred_check_branch
          %186 = sbr.rel (%p184) target = $region24
        $region23: #{tpu_custom_call.1} parent=11 // pred_region
          %s187 = smul.u32 8, %s23
          %p188 = scmp.lt.s32.totalorder %s187, 7
          %s189 = scalar_select %p188, %s187, 7
          %s190 = smul.addr %s189, 8
          %s191 = scalar_lea.vmem %s3, %s190
          %s192 = smul.u32 8, %s23
        $region24: #{tpu_custom_call.1} parent=11 // pred_fallthru
          _
      $region12: #{tpu_custom_call.1} parent=5 // pred_fallthru
        _
      %p193 = scmp.lt.s32.totalorder %s13, 2
      // Predicated region
      $region25: #{tpu_custom_call.1} parent=5 // pred_check
        %p194 = pneg %p193
      $region26: #{tpu_custom_call.1} parent=5 // pred_check_branch
        %196 = sbr.rel (%p194) target = $region28
      $region27: #{tpu_custom_call.1} parent=5 // pred_region
        // Predicated region
        $region29: #{tpu_custom_call.1} parent=27 // pred_check
          %p197 = pneg %p45
        $region30: #{tpu_custom_call.1} parent=27 // pred_check_branch
          %199 = sbr.rel (%p197) target = $region32
        $region31: #{tpu_custom_call.1} parent=27 // pred_region
          %p200 = scmp.lt.s32.totalorder %s20, 1
          %s201 = scalar_select %p200, %s20, 1
          %s202 = smul.addr %s201, 8
          %s203 = scalar_lea.vmem %s0, %s202
        $region32: #{tpu_custom_call.1} parent=27 // pred_fallthru
          _
      $region28: #{tpu_custom_call.1} parent=5 // pred_fallthru
        _
      %p204 = scmp.le.s32.totalorder 1, %s13
      %p205 = scmp.lt.s32.totalorder %s13, 3
      %p206 = pnand %p204, %p205
      %p207 = pneg %p206
      // Predicated region
      $region33: #{tpu_custom_call.1} parent=5 // pred_check
        _
      $region34: #{tpu_custom_call.1} parent=5 // pred_check_branch
        %209 = sbr.rel (%p206) target = $region36
      $region35: #{tpu_custom_call.1} parent=5 // pred_region
        %s210 = ssub.s32 %s13, 1
        %p211 = scmp.lt.s32.totalorder %s22, 1
        %s212 = scalar_select %p211, %s22, 1
        %s213 = smul.addr %s212, 8
        %s214 = scalar_lea.vmem %s0, %s213
        %p215 = pneg %p51
        %p216 = pneg %p48
        %p217 = scmp.lt.s32.totalorder %s23, 0
        %s218 = scalar_select %p217, %s23, 0
        %s219 = smul.addr %s218, 8
        %s220 = scalar_lea.vmem %s1, %s219
        %p221 = pneg %p77
        %p222 = pneg %p74
        %p223 = scmp.lt.s32.totalorder %s23, 0
        %s224 = scalar_select %p223, %s23, 0
        %s225 = smul.addr %s224, 8
        %s226 = scalar_lea.vmem %s2, %s225
        %p227 = pneg %p103
        %p228 = pneg %p100
        %s229 = smul.u32 8, %s23
        %p230 = scmp.lt.s32.totalorder %s229, 7
        %s231 = scalar_select %p230, %s229, 7
        %s232 = smul.addr %s231, 8
        %s233 = scalar_lea.vmem %s3, %s232
        %p234 = pneg %p129
        %p235 = pneg %p126
        %p236 = pneg %p155
        %p237 = pneg %p152
        %s238 = sand.u32 %s142, 1
        %s239 = scalar_lea.sflag [#allocation4], %s238
        %s240 = sand.u32 %s142, 1
        %s241 = smul.addr %s240, 8
        %s242 = scalar_lea.vmem [#allocation3], %s241
        %p243 = scmp.lt.s32.totalorder %s22, 1
        %s244 = scalar_select %p243, %s22, 1
        %s245 = smul.addr %s244, 8
        %s246 = scalar_lea.vmem %s0, %s245
        %p247 = scmp.lt.s32.totalorder %s23, 0
        %s248 = scalar_select %p247, %s23, 0
        %s249 = smul.addr %s248, 8
        %s250 = scalar_lea.vmem %s1, %s249
        %p251 = scmp.lt.s32.totalorder %s23, 0
        %s252 = scalar_select %p251, %s23, 0
        %s253 = smul.addr %s252, 8
        %s254 = scalar_lea.vmem %s2, %s253
        %s255 = smul.u32 8, %s23
        %p256 = scmp.lt.s32.totalorder %s255, 7
        %s257 = scalar_select %p256, %s255, 7
        %s258 = smul.addr %s257, 8
        %s259 = scalar_lea.vmem %s3, %s258
        %s260 = smul.u32 8, %s23
        %p261 = scmp.eq.s32.totalorder %s23, 0
        // Predicated region
        $region37: #{tpu_custom_call.1} parent=35 // pred_check
          %p262 = pneg %p261
        $region38: #{tpu_custom_call.1} parent=35 // pred_check_branch
          %264 = sbr.rel (%p262) target = $region40
        $region39: #{tpu_custom_call.1} parent=35 // pred_region
          %vm265 = vcmask 261120
          %266 = vst.msk [vmem:[#allocation2] sm:$0xff] %vm265, 0.0
        $region40: #{tpu_custom_call.1} parent=35 // pred_fallthru
          _
        %v267 = vld [vmem:[%s246] sm:$0xff]
        %v268 = vld [vmem:[%s250] sm:$0xff]
        %v269 = vld [vmem:[%s250 + $0x8] sm:$0xff]
        %v270 = vld [vmem:[%s250 + $0x10] sm:$0xff]
        %v271 = vld [vmem:[%s250 + $0x18] sm:$0xff]
        %vm272 = vcmask 261120
        %v274 = vsel %vm272, %v267, 0
        %276 = vmatprep.subr.mxu0 0.0
        %277 = vmatpush1.msra.mxu0 0.0
        %278 = vmatprep.subr.mxu0 0.0
        %279 = vmatpush1.msra.mxu0 0.0
        %280 = vmatprep.subr.mxu0 0.0
        %281 = vmatpush1.msra.mxu0 0.0
        %282 = vmatprep.subr.mxu0 0.0
        %283 = vmatpush1.msra.mxu0 0.0
        %284 = vmatprep.subr.mxu0 0.0
        %285 = vmatpush1.msra.mxu0 0.0
        %286 = vmatprep.subr.mxu0 0.0
        %287 = vmatpush1.msra.mxu0 0.0
        %288 = vmatprep.subr.mxu0 0.0
        %289 = vmatpush1.msra.mxu0 0.0
        %290 = vmatprep.subr.mxu0 0.0
        %291 = vmatpush1.msra.mxu0 0.0
        %292 = vmatprep.subr.mxu0 0.0
        %293 = vmatpush1.msra.mxu0 0.0
        %294 = vmatprep.subr.mxu0 0.0
        %295 = vmatpush1.msra.mxu0 0.0
        %296 = vmatprep.subr.mxu0 0.0
        %297 = vmatpush1.msra.mxu0 0.0
        %298 = vmatprep.subr.mxu0 0.0
        %299 = vmatpush1.msra.mxu0 0.0
        %300 = vmatprep.subr.mxu0 0.0
        %301 = vmatpush1.msra.mxu0 %v271
        %302 = vmatprep.subr.mxu0 0.0
        %303 = vmatpush1.msra.mxu0 %v270
        %304 = vmatprep.subr.mxu0 0.0
        %305 = vmatpush1.msra.mxu0 %v269
        %306 = vmatprep.subr.mxu0 0.0
        %307 = vmatpush1.msra.mxu0 %v268
        %308 = vmatprep.subr.mxu0 0.0
        %309 = vmatpush2.msra.mxu0 0.0
        %310 = vmatprep.subr.mxu0 0.0
        %311 = vmatpush2.msra.mxu0 0.0
        %312 = vmatprep.subr.mxu0 0.0
        %313 = vmatpush2.msra.mxu0 0.0
        %314 = vmatprep.subr.mxu0 0.0
        %315 = vmatpush2.msra.mxu0 0.0
        %316 = vmatprep.subr.mxu0 0.0
        %317 = vmatpush2.msra.mxu0 0.0
        %318 = vmatprep.subr.mxu0 0.0
        %319 = vmatpush2.msra.mxu0 0.0
        %320 = vmatprep.subr.mxu0 0.0
        %321 = vmatpush2.msra.mxu0 0.0
        %322 = vmatprep.subr.mxu0 0.0
        %323 = vmatpush2.msra.mxu0 0.0
        %324 = vmatprep.subr.mxu0 0.0
        %325 = vmatpush2.msra.mxu0 0.0
        %326 = vmatprep.subr.mxu0 0.0
        %327 = vmatpush2.msra.mxu0 0.0
        %328 = vmatprep.subr.mxu0 0.0
        %329 = vmatpush2.msra.mxu0 0.0
        %330 = vmatprep.subr.mxu0 0.0
        %331 = vmatpush2.msra.mxu0 0.0
        %332 = vmatprep.subr.mxu0 0.0
        %333 = vmatpush2.msra.mxu0 0.0
        %334 = vmatprep.subr.mxu0 0.0
        %335 = vmatpush2.msra.mxu0 0.0
        %336 = vmatprep.subr.mxu0 0.0
        %337 = vmatpush2.msra.mxu0 0.0
        %338 = vmatprep.subr.mxu0 0.0
        %339 = vmatpush2.msra.mxu0 0.0
        %340 = vmatprep.mubr.f32.mxu0 0.0
        %341 = vmatmul.mubr.f32.gmra.mxu0 %v274
        %v342 = vpop.f32.mrf.mxu0
        %v343 = vadd.f32 0.0, %v342
        %v344 = vpop.f32.mrf.mxu0
        %345 = vdwg.mxu0
        %v346 = vld [vmem:[%s254] sm:$0xff]
        %v347 = vld [vmem:[%s254 + $0x8] sm:$0xff]
        %v348 = vld [vmem:[%s254 + $0x10] sm:$0xff]
        %v349 = vld [vmem:[%s254 + $0x18] sm:$0xff]
        %350 = vmatprep.subr.mxu0 0.0
        %351 = vmatpush1.msra.mxu0 0.0
        %352 = vmatprep.subr.mxu0 0.0
        %353 = vmatpush1.msra.mxu0 0.0
        %354 = vmatprep.subr.mxu0 0.0
        %355 = vmatpush1.msra.mxu0 0.0
        %356 = vmatprep.subr.mxu0 0.0
        %357 = vmatpush1.msra.mxu0 0.0
        %358 = vmatprep.subr.mxu0 0.0
        %359 = vmatpush1.msra.mxu0 0.0
        %360 = vmatprep.subr.mxu0 0.0
        %361 = vmatpush1.msra.mxu0 0.0
        %362 = vmatprep.subr.mxu0 0.0
        %363 = vmatpush1.msra.mxu0 0.0
        %364 = vmatprep.subr.mxu0 0.0
        %365 = vmatpush1.msra.mxu0 0.0
        %366 = vmatprep.subr.mxu0 0.0
        %367 = vmatpush1.msra.mxu0 0.0
        %368 = vmatprep.subr.mxu0 0.0
        %369 = vmatpush1.msra.mxu0 0.0
        %370 = vmatprep.subr.mxu0 0.0
        %371 = vmatpush1.msra.mxu0 0.0
        %372 = vmatprep.subr.mxu0 0.0
        %373 = vmatpush1.msra.mxu0 0.0
        %374 = vmatprep.subr.mxu0 0.0
        %375 = vmatpush1.msra.mxu0 %v349
        %376 = vmatprep.subr.mxu0 0.0
        %377 = vmatpush1.msra.mxu0 %v348
        %378 = vmatprep.subr.mxu0 0.0
        %379 = vmatpush1.msra.mxu0 %v347
        %380 = vmatprep.subr.mxu0 0.0
        %381 = vmatpush1.msra.mxu0 %v346
        %382 = vmatprep.subr.mxu0 0.0
        %383 = vmatpush2.msra.mxu0 0.0
        %384 = vmatprep.subr.mxu0 0.0
        %385 = vmatpush2.msra.mxu0 0.0
        %386 = vmatprep.subr.mxu0 0.0
        %387 = vmatpush2.msra.mxu0 0.0
        %388 = vmatprep.subr.mxu0 0.0
        %389 = vmatpush2.msra.mxu0 0.0
        %390 = vmatprep.subr.mxu0 0.0
        %391 = vmatpush2.msra.mxu0 0.0
        %392 = vmatprep.subr.mxu0 0.0
        %393 = vmatpush2.msra.mxu0 0.0
        %394 = vmatprep.subr.mxu0 0.0
        %395 = vmatpush2.msra.mxu0 0.0
        %396 = vmatprep.subr.mxu0 0.0
        %397 = vmatpush2.msra.mxu0 0.0
        %398 = vmatprep.subr.mxu0 0.0
        %399 = vmatpush2.msra.mxu0 0.0
        %400 = vmatprep.subr.mxu0 0.0
        %401 = vmatpush2.msra.mxu0 0.0
        %402 = vmatprep.subr.mxu0 0.0
        %403 = vmatpush2.msra.mxu0 0.0
        %404 = vmatprep.subr.mxu0 0.0
        %405 = vmatpush2.msra.mxu0 0.0
        %406 = vmatprep.subr.mxu0 0.0
        %407 = vmatpush2.msra.mxu0 0.0
        %408 = vmatprep.subr.mxu0 0.0
        %409 = vmatpush2.msra.mxu0 0.0
        %410 = vmatprep.subr.mxu0 0.0
        %411 = vmatpush2.msra.mxu0 0.0
        %412 = vmatprep.subr.mxu0 0.0
        %413 = vmatpush2.msra.mxu0 0.0
        %414 = vmatprep.mubr.f32.mxu0 0.0
        %415 = vmatmul.mubr.f32.gmra.mxu0 %v274
        %v416 = vpop.f32.mrf.mxu0
        %v417 = vadd.f32 0.0, %v416
        %v418 = vpop.f32.mrf.mxu0
        %419 = vdwg.mxu0
        %v420 = vxor.u32 %v417, 2147483648
        %v421 = vmul.f32 %v420, 1.442695
        %v422 = vpow.pop %v421
        %v423 = vadd.f32 %v422, 1.0
        %v424 = vrcp.pop %v423
        %v425 = vmul.f32 1.0, %v424
        %v426 = vmul.f32 %v417, %v425
        %v427 = vmul.f32 %v343, %v426
        %v428 = vld [vmem:[#allocation2] sm:$0xff]
        %v429 = vld [vmem:[%s259] sm:$0xff]
        %v430 = vld [vmem:[%s259 + $0x8] sm:$0xff]
        %v431 = vld [vmem:[%s259 + $0x10] sm:$0xff]
        %v432 = vld [vmem:[%s259 + $0x18] sm:$0xff]
        %v433 = vld [vmem:[%s259 + $0x20] sm:$0xff]
        %v434 = vld [vmem:[%s259 + $0x28] sm:$0xff]
        %v435 = vld [vmem:[%s259 + $0x30] sm:$0xff]
        %v436 = vld [vmem:[%s259 + $0x38] sm:$0xff]
        %vm437 = vcmask 523264
        %v439 = vsel %vm437, %v427, 0
        %441 = vmatprep.subr.mxu0 0.0
        %442 = vmatpush1.msra.mxu0 0.0
        %443 = vmatprep.subr.mxu0 0.0
        %444 = vmatpush1.msra.mxu0 0.0
        %445 = vmatprep.subr.mxu0 0.0
        %446 = vmatpush1.msra.mxu0 0.0
        %447 = vmatprep.subr.mxu0 0.0
        %448 = vmatpush1.msra.mxu0 0.0
        %449 = vmatprep.subr.mxu0 0.0
        %450 = vmatpush1.msra.mxu0 0.0
        %451 = vmatprep.subr.mxu0 0.0
        %452 = vmatpush1.msra.mxu0 0.0
        %453 = vmatprep.subr.mxu0 0.0
        %454 = vmatpush1.msra.mxu0 0.0
        %455 = vmatprep.subr.mxu0 0.0
        %456 = vmatpush1.msra.mxu0 0.0
        %457 = vmatprep.subr.mxu0 0.0
        %458 = vmatpush1.msra.mxu0 %v436
        %459 = vmatprep.subr.mxu0 0.0
        %460 = vmatpush1.msra.mxu0 %v435
        %461 = vmatprep.subr.mxu0 0.0
        %462 = vmatpush1.msra.mxu0 %v434
        %463 = vmatprep.subr.mxu0 0.0
        %464 = vmatpush1.msra.mxu0 %v433
        %465 = vmatprep.subr.mxu0 0.0
        %466 = vmatpush1.msra.mxu0 %v432
        %467 = vmatprep.subr.mxu0 0.0
        %468 = vmatpush1.msra.mxu0 %v431
        %469 = vmatprep.subr.mxu0 0.0
        %470 = vmatpush1.msra.mxu0 %v430
        %471 = vmatprep.subr.mxu0 0.0
        %472 = vmatpush1.msra.mxu0 %v429
        %473 = vmatprep.subr.mxu0 0.0
        %474 = vmatpush2.msra.mxu0 0.0
        %475 = vmatprep.subr.mxu0 0.0
        %476 = vmatpush2.msra.mxu0 0.0
        %477 = vmatprep.subr.mxu0 0.0
        %478 = vmatpush2.msra.mxu0 0.0
        %479 = vmatprep.subr.mxu0 0.0
        %480 = vmatpush2.msra.mxu0 0.0
        %481 = vmatprep.subr.mxu0 0.0
        %482 = vmatpush2.msra.mxu0 0.0
        %483 = vmatprep.subr.mxu0 0.0
        %484 = vmatpush2.msra.mxu0 0.0
        %485 = vmatprep.subr.mxu0 0.0
        %486 = vmatpush2.msra.mxu0 0.0
        %487 = vmatprep.subr.mxu0 0.0
        %488 = vmatpush2.msra.mxu0 0.0
        %489 = vmatprep.subr.mxu0 0.0
        %490 = vmatpush2.msra.mxu0 0.0
        %491 = vmatprep.subr.mxu0 0.0
        %492 = vmatpush2.msra.mxu0 0.0
        %493 = vmatprep.subr.mxu0 0.0
        %494 = vmatpush2.msra.mxu0 0.0
        %495 = vmatprep.subr.mxu0 0.0
        %496 = vmatpush2.msra.mxu0 0.0
        %497 = vmatprep.subr.mxu0 0.0
        %498 = vmatpush2.msra.mxu0 0.0
        %499 = vmatprep.subr.mxu0 0.0
        %500 = vmatpush2.msra.mxu0 0.0
        %501 = vmatprep.subr.mxu0 0.0
        %502 = vmatpush2.msra.mxu0 0.0
        %503 = vmatprep.subr.mxu0 0.0
        %504 = vmatpush2.msra.mxu0 0.0
        %505 = vmatprep.mubr.f32.mxu0 0.0
        %506 = vmatmul.mubr.f32.gmra.mxu0 %v439
        %v507 = vpop.f32.mrf.mxu0
        %v508 = vadd.f32 0.0, %v507
        %v509 = vpop.f32.mrf.mxu0
        %510 = vdwg.mxu0
        %v511 = vadd.f32 %v428, %v508
        %512 = vst.msk [vmem:[#allocation2] sm:$0xff] %vm272, %v511
        // Predicated region
        $region41: #{tpu_custom_call.1} parent=35 // pred_check
          %p513 = pneg %p261
        $region42: #{tpu_custom_call.1} parent=35 // pred_check_branch
          %515 = sbr.rel (%p513) target = $region44
        $region43: #{tpu_custom_call.1} parent=35 // pred_region
          %v516 = vld [vmem:[#allocation2] sm:$0xff]
          %517 = vst.msk [vmem:[%s242] sm:$0xff] %vm272, %v516
        $region44: #{tpu_custom_call.1} parent=35 // pred_fallthru
          _
        %s518 = sand.u32 %s142, 1
        %s519 = scalar_lea.sflag [#allocation4], %s518
        %s520 = sand.u32 %s142, 1
        %s521 = smul.addr %s520, 8
        %s522 = scalar_lea.vmem [#allocation3], %s521
        // Predicated region
        $region45: #{tpu_custom_call.1} parent=35 // pred_check
          %p523 = pneg %p152
        $region46: #{tpu_custom_call.1} parent=35 // pred_check_branch
          %525 = sbr.rel (%p523) target = $region48
        $region47: #{tpu_custom_call.1} parent=35 // pred_region
          %s527 = ssub.s32 128, 128
          %528 = vsyncadd %s519, %s527
          %s529 = smul.addr %s22, 128
          %s530 = scalar_lea.hbm %s4, %s529
          %s532 = sshll.u32 %s522, 4
          %s533 = int_to_ptr.vmem [resolvable:$true] %s532
          %535 = dma.vmem_to_hbm [thread:$0]  %s533, 128, %s530, %s519
        $region48: #{tpu_custom_call.1} parent=35 // pred_fallthru
          _
      $region36: #{tpu_custom_call.1} parent=5 // pred_fallthru
        _
      %p536 = scmp.le.s32.totalorder 2, %s13
      // Predicated region
      $region49: #{tpu_custom_call.1} parent=5 // pred_check
        %p537 = pneg %p536
      $region50: #{tpu_custom_call.1} parent=5 // pred_check_branch
        %539 = sbr.rel (%p537) target = $region52
      $region51: #{tpu_custom_call.1} parent=5 // pred_region
        %s540 = ssub.s32 %s13, 2
        // Predicated region
        $region53: #{tpu_custom_call.1} parent=51 // pred_check
          %p541 = pneg %p158
        $region54: #{tpu_custom_call.1} parent=51 // pred_check_branch
          %543 = sbr.rel (%p541) target = $region56
        $region55: #{tpu_custom_call.1} parent=51 // pred_region
          %s544 = sand.u32 %s143, 1
          %s545 = scalar_lea.sflag [#allocation4], %s544
          %s546 = sand.u32 %s143, 1
          %s547 = smul.addr %s546, 8
          %s548 = scalar_lea.vmem [#allocation3], %s547
          %549 = dma.done %s545, 128
        $region56: #{tpu_custom_call.1} parent=51 // pred_fallthru
          _
      $region52: #{tpu_custom_call.1} parent=5 // pred_fallthru
        _
    $region6: #{tpu_custom_call.1} parent=1 // loop_footer
      %s17 = sadd.s32 1, %s13
    $region7: #{tpu_custom_call.1} parent=1 // loop_footer_branch
      %12 = sbr.rel target = $region3
    $region8: #{tpu_custom_call.1} parent=1 // loop_exit
      _
    %550 = vsyncpa [#allocation4], 1
    %s551 = scalar_lea.sflag [#allocation4], 1
    %552 = vsyncpa %s551, 1

</llo_original>
